<compile_context>
chip_gen: v5e
topology: v5e:2x2
jax: 0.10.0
libtpu: 0.0.40
codegen_flags: <defaults>
</compile_context>

<pallas_src>
import functools

import jax
import jax.numpy as jnp
from jax.experimental import pallas as pl
from jax.experimental.pallas import tpu as pltpu

EPS = 1e-4  # ProtoPNet-style similarity epsilon


def _round_up(x, m):
    return (x + m - 1) // m * m


def _pick_batch_tile(n, hw):
    """Largest divisor of n whose fused tile stays within ~2048 lanes/step."""
    cap = max(1, 2048 // max(hw, 1))
    best = 1
    for nb in range(1, n + 1):
        if n % nb == 0 and nb <= cap:
            best = nb
    return best


def _cabrnet_kernel(x_ref, proto_ref, psq_ref, dist_ref, sim_ref, smax_ref,
                    *, nb, hw):
    # x_ref:    (1, D, Lp)  NB images' features, batch folded into lanes, padded.
    # proto_ref:(P, D)      prototypes (grid-invariant).
    # psq_ref:  (P, 1)      precomputed ||p||^2 (hoisted out of the kernel).
    x = x_ref[0]                                     # (D, Lp)
    p = proto_ref[...]                               # (P, D)
    p_sq = psq_ref[...]                              # (P, 1)

    # Squared L2 distances via ||p||^2 - 2 p.x + ||x||^2.  The single
    # (P, D) @ (D, Lp) product is the MXU hot path, lane-dense (Lp % 128 == 0).
    x_sq = jnp.sum(x * x, axis=0, keepdims=True)                    # (1, Lp)
    xp = jnp.dot(p, x, preferred_element_type=jnp.float32)          # (P, Lp)
    dist = jnp.maximum(p_sq - 2.0 * xp + x_sq, 0.0)                 # (P, Lp)

    # ProtoPNet log-similarity (reciprocal-multiply instead of a divide).
    sim = jnp.log((dist + 1.0) * pl.reciprocal(dist + EPS, approx=False))

    dist_ref[0] = dist                                              # unmasked vst
    sim_ref[0] = sim

    # Per-image max over its own HW lanes.  Lane-range masks exclude both the
    # other images and the zero-padding lanes (which hold garbage distances).
    lane = jax.lax.broadcasted_iota(jnp.int32, sim.shape, 1)        # (P, Lp)
    cols = []
    for n in range(nb):  # nb is a small static constant -> unrolled
        in_img = (lane >= n * hw) & (lane < (n + 1) * hw)
        cols.append(jnp.max(jnp.where(in_img, sim, -jnp.inf),
                            axis=1, keepdims=True))                 # (P, 1)
    smax_ref[0] = jnp.concatenate(cols, axis=1)                     # (P, NB)


def cabrnet_forward(features_nchw, prototypes, last_layer_w):
    """Runs the CaBRNet classifier head.

    Args:
      features_nchw: (N, D, H, W) float32 conv features (PyTorch NCHW).
      prototypes:    (P, D) float32 prototypes.
      last_layer_w:  (P, C) float32 prototype->class weights (no bias).

    Returns:
      distances:    (N, P, H, W)
      similarities: (N, P, H, W)
      logits:       (N, C)
    """
    N, D, H, W = features_nchw.shape
    P, _ = prototypes.shape
    HW = H * W

    NB = _pick_batch_tile(N, HW)      # images fused per grid step (== N here)
    S = N // NB                       # number of grid steps
    L = NB * HW                       # valid lanes per step
    Lp = _round_up(L, 128)            # lane-dense (unmasked) store width

    # NCHW -> (S, D, NB*HW) with the batch tile folded into the lane axis,
    # zero-padded to Lp.  Pure layout plumbing done once by XLA in the wrapper.
    x = features_nchw.reshape(S, NB, D, HW).transpose(0, 2, 1, 3).reshape(S, D, L)
    x = jnp.pad(x, ((0, 0), (0, 0), (0, Lp - L)))

    # Hoist the prototype squared norms out of the kernel.
    p_sq = jnp.sum(prototypes * prototypes, axis=1, keepdims=True)   # (P, 1)

    out_shapes = (
        jax.ShapeDtypeStruct((S, P, Lp), jnp.float32),  # distances (lane-padded)
        jax.ShapeDtypeStruct((S, P, Lp), jnp.float32),  # similarities
        jax.ShapeDtypeStruct((S, P, NB), jnp.float32),  # per-image prototype max
    )

    kernel = functools.partial(_cabrnet_kernel, nb=NB, hw=HW)

    dist_t, sim_t, smax_t = pl.pallas_call(
        kernel,
        out_shape=out_shapes,
        grid=(S,),
        in_specs=[
            pl.BlockSpec((1, D, Lp), lambda b: (b, 0, 0)),
            pl.BlockSpec((P, D), lambda b: (0, 0)),
            pl.BlockSpec((P, 1), lambda b: (0, 0)),
        ],
        out_specs=[
            pl.BlockSpec((1, P, Lp), lambda b: (b, 0, 0)),
            pl.BlockSpec((1, P, Lp), lambda b: (b, 0, 0)),
            pl.BlockSpec((1, P, NB), lambda b: (b, 0, 0)),
        ],
        compiler_params=pltpu.CompilerParams(
            # Batch-tile axis; on v7x with production multi-step grids,
            # pltpu.CORE_PARALLEL here shards the batch tiles across both TCs.
            dimension_semantics=("parallel",),
        ),
    )(x, prototypes, p_sq)

    # Recover the PyTorch (N, P, H, W) layout: drop lane padding and unfold the
    # batch tile off the lane axis (layout plumbing in XLA).
    def unfold(o):
        o = o[:, :, :L].reshape(S, P, NB, HW).transpose(0, 2, 1, 3)
        return o.reshape(N, P, H, W)

    dist_nphw = unfold(dist_t)
    sim_nphw = unfold(sim_t)

    # Tiny prototype->class linear layer on the (N, P) max-pooled similarities.
    smax = smax_t.transpose(0, 2, 1).reshape(N, P)
    logits = smax @ last_layer_w                                     # (N, C)
    return dist_nphw, sim_nphw, logits


def _reference(features_nchw, prototypes, last_layer_w):
    N, D, H, W = features_nchw.shape
    x = jnp.transpose(features_nchw, (0, 2, 3, 1)).reshape(N, H * W, D)
    dist = (
        jnp.sum(x * x, axis=-1, keepdims=True)
        - 2.0 * jnp.einsum("nld,pd->nlp", x, prototypes)
        + jnp.sum(prototypes * prototypes, axis=-1)[None, None, :]
    )
    dist = jnp.maximum(dist, 0.0)
    sim = jnp.log((dist + 1.0) / (dist + EPS))
    logits = jnp.max(sim, axis=1) @ last_layer_w
    dist_nphw = jnp.transpose(dist.reshape(N, H, W, -1), (0, 3, 1, 2))
    sim_nphw = jnp.transpose(sim.reshape(N, H, W, -1), (0, 3, 1, 2))
    return dist_nphw, sim_nphw, logits


if __name__ == "__main__":
    # Small, deterministic shapes consistent with the module:
    # num_classes=4, num_features=64, 8 prototypes per class -> P=32,
    # conv feature map 7x7, batch=2.
    num_classes = 4
    num_features = 64
    protos_per_class = 8
    num_prototypes = num_classes * protos_per_class
    N, H, W = 2, 7, 7

    key = jax.random.PRNGKey(0)
    k_feat, k_proto, k_w = jax.random.split(key, 3)

    features = jax.random.normal(k_feat, (N, num_features, H, W), dtype=jnp.float32)
    # prototypes_init_mode = 'SHIFTED_NORMAL': normal shifted to positive mean.
    prototypes = 0.5 + 0.1 * jax.random.normal(
        k_proto, (num_prototypes, num_features), dtype=jnp.float32
    )
    # Prototype -> class linear layer (no bias), deterministic init.
    last_layer_w = 0.05 * jax.random.normal(
        k_w, (num_prototypes, num_classes), dtype=jnp.float32
    )

    dist, sim, logits = cabrnet_forward(features, prototypes, last_layer_w)
    jax.block_until_ready((dist, sim, logits))

    dist_ref, sim_ref, logits_ref = _reference(features, prototypes, last_layer_w)
    assert dist.shape == (N, num_prototypes, H, W)
    assert sim.shape == (N, num_prototypes, H, W)
    assert logits.shape == (N, num_classes)
    assert jnp.allclose(dist, dist_ref, rtol=1e-4, atol=1e-4)
    assert jnp.allclose(sim, sim_ref, rtol=1e-4, atol=1e-4)
    assert jnp.allclose(logits, logits_ref, rtol=1e-4, atol=1e-4)

    print("KERNEL_OK")
</pallas_src>

<mosaic_0001>
module attributes {stable_mosaic.version = 11 : i64} {
  func.func @_cabrnet_kernel(%arg0: i32, %arg1: memref<1x64x128xf32, #tpu.memory_space<vmem>>, %arg2: memref<32x64xf32, #tpu.memory_space<vmem>>, %arg3: memref<32x1xf32, #tpu.memory_space<vmem>>, %arg4: memref<1x32x128xf32, #tpu.memory_space<vmem>>, %arg5: memref<1x32x128xf32, #tpu.memory_space<vmem>>, %arg6: memref<1x32x2xf32, #tpu.memory_space<vmem>>) attributes {dimension_semantics = [#tpu.dimension_semantics<parallel>], iteration_bounds = array<i64: 1>, scalar_prefetch = 0 : i64, scratch_operands = 0 : i64, tpu.core_type = #tpu.core_type<tc>, window_params = [{transform_indices = @transform_0, window_bounds = array<i64: 1, 64, 128>}, {pipeline_mode = #tpu.pipeline_mode<synchronous>, transform_indices = @transform_1, window_bounds = array<i64: 32, 64>}, {pipeline_mode = #tpu.pipeline_mode<synchronous>, transform_indices = @transform_2, window_bounds = array<i64: 32, 1>}, {transform_indices = @transform_3, window_bounds = array<i64: 1, 32, 128>}, {transform_indices = @transform_4, window_bounds = array<i64: 1, 32, 128>}, {transform_indices = @transform_5, window_bounds = array<i64: 1, 32, 2>}]} {
    %c0 = arith.constant 0 : index
    %c0_0 = arith.constant 0 : index
    %c0_1 = arith.constant 0 : index
    %0 = vector.load %arg1[%c0, %c0_0, %c0_1] : memref<1x64x128xf32, #tpu.memory_space<vmem>>, vector<1x64x128xf32>
    %1 = vector.shape_cast %0 : vector<1x64x128xf32> to vector<64x128xf32>
    %c0_2 = arith.constant 0 : index
    %c0_3 = arith.constant 0 : index
    %2 = vector.load %arg2[%c0_2, %c0_3] : memref<32x64xf32, #tpu.memory_space<vmem>>, vector<32x64xf32>
    %c0_4 = arith.constant 0 : index
    %c0_5 = arith.constant 0 : index
    %3 = vector.load %arg3[%c0_4, %c0_5] : memref<32x1xf32, #tpu.memory_space<vmem>>, vector<32x1xf32>
    %4 = arith.mulf %1, %1 : vector<64x128xf32>
    %cst = arith.constant dense<0.000000e+00> : vector<128xf32>
    %5 = vector.multi_reduction <add>, %4, %cst [0] : vector<64x128xf32> to vector<128xf32>
    %6 = vector.shape_cast %5 : vector<128xf32> to vector<1x128xf32>
    %cst_6 = arith.constant dense<0.000000e+00> : vector<32x128xf32>
    %7 = tpu.matmul %2, %1, %cst_6 {dimension_numbers = #tpu.dot_dimension_numbers<[1], [0], [0], [1], [0, 0, 1, 1], [], []>} : vector<32x64xf32>, vector<64x128xf32>, vector<32x128xf32> -> vector<32x128xf32>
    %cst_7 = arith.constant 2.000000e+00 : f32
    %8 = vector.broadcast %cst_7 : f32 to vector<32x128xf32>
    %9 = arith.mulf %8, %7 : vector<32x128xf32>
    %10 = vector.broadcast %3 : vector<32x1xf32> to vector<32x128xf32>
    %11 = arith.subf %10, %9 : vector<32x128xf32>
    %12 = vector.broadcast %6 : vector<1x128xf32> to vector<32x128xf32>
    %13 = arith.addf %11, %12 : vector<32x128xf32>
    %cst_8 = arith.constant 0.000000e+00 : f32
    %14 = vector.broadcast %cst_8 : f32 to vector<32x128xf32>
    %15 = arith.maximumf %13, %14 : vector<32x128xf32>
    %cst_9 = arith.constant 1.000000e+00 : f32
    %16 = vector.broadcast %cst_9 : f32 to vector<32x128xf32>
    %17 = arith.addf %15, %16 : vector<32x128xf32>
    %cst_10 = arith.constant 9.99999974E-5 : f32
    %18 = vector.broadcast %cst_10 : f32 to vector<32x128xf32>
    %19 = arith.addf %15, %18 : vector<32x128xf32>
    %20 = tpu.reciprocal %19 : vector<32x128xf32> -> vector<32x128xf32>
    %21 = arith.mulf %17, %20 : vector<32x128xf32>
    %22 = math.log %21 : vector<32x128xf32>
    %c0_11 = arith.constant 0 : index
    %c0_12 = arith.constant 0 : index
    %c0_13 = arith.constant 0 : index
    %23 = vector.load %arg4[%c0_11, %c0_12, %c0_13] : memref<1x32x128xf32, #tpu.memory_space<vmem>>, vector<1x32x128xf32>
    %24 = vector.shape_cast %23 : vector<1x32x128xf32> to vector<32x128xf32>
    %25 = vector.shape_cast %15 : vector<32x128xf32> to vector<1x32x128xf32>
    tpu.vector_store %arg4[%c0_11, %c0_12, %c0_13], %25 {strides = array<i32>} : memref<1x32x128xf32, #tpu.memory_space<vmem>>, vector<1x32x128xf32>,
    %c0_14 = arith.constant 0 : index
    %c0_15 = arith.constant 0 : index
    %c0_16 = arith.constant 0 : index
    %26 = vector.load %arg5[%c0_14, %c0_15, %c0_16] : memref<1x32x128xf32, #tpu.memory_space<vmem>>, vector<1x32x128xf32>
    %27 = vector.shape_cast %26 : vector<1x32x128xf32> to vector<32x128xf32>
    %28 = vector.shape_cast %22 : vector<32x128xf32> to vector<1x32x128xf32>
    tpu.vector_store %arg5[%c0_14, %c0_15, %c0_16], %28 {strides = array<i32>} : memref<1x32x128xf32, #tpu.memory_space<vmem>>, vector<1x32x128xf32>,
    %29 = tpu.iota {dimensions = array<i32: 1>} : vector<32x128xi32>
    %c0_i32 = arith.constant 0 : i32
    %30 = vector.broadcast %c0_i32 : i32 to vector<32x128xi32>
    %31 = arith.cmpi sge, %29, %30 : vector<32x128xi32>
    %c49_i32 = arith.constant 49 : i32
    %32 = vector.broadcast %c49_i32 : i32 to vector<32x128xi32>
    %33 = arith.cmpi slt, %29, %32 : vector<32x128xi32>
    %34 = arith.andi %31, %33 : vector<32x128xi1>
    %cst_17 = arith.constant 0xFF800000 : f32
    %35 = vector.broadcast %cst_17 : f32 to vector<32x128xf32>
    %36 = arith.select %34, %22, %35 : vector<32x128xi1>, vector<32x128xf32>
    %cst_18 = arith.constant dense<0xFF800000> : vector<32xf32>
    %37 = vector.multi_reduction <maximumf>, %36, %cst_18 [1] : vector<32x128xf32> to vector<32xf32>
    %38 = vector.shape_cast %37 : vector<32xf32> to vector<32x1xf32>
    %c49_i32_19 = arith.constant 49 : i32
    %39 = vector.broadcast %c49_i32_19 : i32 to vector<32x128xi32>
    %40 = arith.cmpi sge, %29, %39 : vector<32x128xi32>
    %c98_i32 = arith.constant 98 : i32
    %41 = vector.broadcast %c98_i32 : i32 to vector<32x128xi32>
    %42 = arith.cmpi slt, %29, %41 : vector<32x128xi32>
    %43 = arith.andi %40, %42 : vector<32x128xi1>
    %cst_20 = arith.constant 0xFF800000 : f32
    %44 = vector.broadcast %cst_20 : f32 to vector<32x128xf32>
    %45 = arith.select %43, %22, %44 : vector<32x128xi1>, vector<32x128xf32>
    %cst_21 = arith.constant dense<0xFF800000> : vector<32xf32>
    %46 = vector.multi_reduction <maximumf>, %45, %cst_21 [1] : vector<32x128xf32> to vector<32xf32>
    %47 = vector.shape_cast %46 : vector<32xf32> to vector<32x1xf32>
    %48 = tpu.concatenate %38, %47 in 1 : vector<32x1xf32>, vector<32x1xf32> -> vector<32x2xf32>
    %c0_22 = arith.constant 0 : index
    %c0_23 = arith.constant 0 : index
    %c0_24 = arith.constant 0 : index
    %49 = vector.load %arg6[%c0_22, %c0_23, %c0_24] : memref<1x32x2xf32, #tpu.memory_space<vmem>>, vector<1x32x2xf32>
    %50 = vector.shape_cast %49 : vector<1x32x2xf32> to vector<32x2xf32>
    %51 = vector.shape_cast %48 : vector<32x2xf32> to vector<1x32x2xf32>
    tpu.vector_store %arg6[%c0_22, %c0_23, %c0_24], %51 {strides = array<i32>} : memref<1x32x2xf32, #tpu.memory_space<vmem>>, vector<1x32x2xf32>,
    return
  }
  func.func @transform_0(%arg0: i32) -> (i32, i32, i32) {
    %c0_i32 = arith.constant 0 : i32
    %c0_i32_0 = arith.constant 0 : i32
    %c0_i32_1 = arith.constant 0 : i32
    return %arg0, %c0_i32, %c0_i32_0 : i32, i32, i32
  }
  func.func @transform_1(%arg0: i32) -> (i32, i32) {
    %c0_i32 = arith.constant 0 : i32
    %c0_i32_0 = arith.constant 0 : i32
    %c0_i32_1 = arith.constant 0 : i32
    return %c0_i32, %c0_i32_0 : i32, i32
  }
  func.func @transform_2(%arg0: i32) -> (i32, i32) {
    %c0_i32 = arith.constant 0 : i32
    %c0_i32_0 = arith.constant 0 : i32
    %c0_i32_1 = arith.constant 0 : i32
    return %c0_i32, %c0_i32_0 : i32, i32
  }
  func.func @transform_3(%arg0: i32) -> (i32, i32, i32) {
    %c0_i32 = arith.constant 0 : i32
    %c0_i32_0 = arith.constant 0 : i32
    %c0_i32_1 = arith.constant 0 : i32
    return %arg0, %c0_i32, %c0_i32_0 : i32, i32, i32
  }
  func.func @transform_4(%arg0: i32) -> (i32, i32, i32) {
    %c0_i32 = arith.constant 0 : i32
    %c0_i32_0 = arith.constant 0 : i32
    %c0_i32_1 = arith.constant 0 : i32
    return %arg0, %c0_i32, %c0_i32_0 : i32, i32, i32
  }
  func.func @transform_5(%arg0: i32) -> (i32, i32, i32) {
    %c0_i32 = arith.constant 0 : i32
    %c0_i32_0 = arith.constant 0 : i32
    %c0_i32_1 = arith.constant 0 : i32
    return %arg0, %c0_i32, %c0_i32_0 : i32, i32, i32
  }
}

</mosaic_0001>

<llo_original>
// kernel: tpu_custom_call.1
$region0: #{tpu_custom_call.1}
  #allocation0 [shape = 'u32[]', space=smem, size = 0x4, offset = 0x4, fixed_abs, tag = 'smem constant byte address 0x4 - core index']
  #allocation1 [shape = 'u32[72,128]{1,0:T(1,128)}', space=vmem, size = 0x9000, scoped, tag = 'internal scratch']
  %s0 = inlined_call_operand.hbm [shape: f32[1,64,128], index: 0, kind: input, shape index: {}]
  %s1 = inlined_call_operand.vmem [shape: f32[32,64], index: 1, kind: input, shape index: {}]
  %s2 = inlined_call_operand.vmem [shape: f32[32,1], index: 2, kind: input, shape index: {}]
  %s3 = inlined_call_operand.hbm [shape: f32[1,32,128], index: 3, kind: output, shape index: {0}]
  %s4 = inlined_call_operand.hbm [shape: f32[1,32,128], index: 4, kind: output, shape index: {1}]
  %s5 = inlined_call_operand.vmem [shape: f32[1,32,2], index: 5, kind: output, shape index: {2}]
  %6 = xla_tuple %s3, %s4, %s5
  %s7 = sld [smem:[#allocation0]]
  $region42: #{tpu_custom_call.1} parent=0
    _
  %s9 = ssub.s32 1, %s7
  %s10 = scalar_select 0, %s9, %s7
  $region1: #{tpu_custom_call.1} parent=0
    #allocation2 [shape = 'u8[32768]{0}', space=vmem, size = 0x8000, scoped, tag = 'input window, operand 0, single buffered']
    #allocation3 [shape = 's32[1]{0}', space=sflag, size = 0x4, scoped, tag = 'scoped memory for tpu_custom_call.1']
    #allocation4 [shape = 's32[1]{0}', space=sflag, size = 0x4, scoped, tag = 'scoped memory for tpu_custom_call.1']
    #allocation5 [shape = 'u8[16384]{0}', space=vmem, size = 0x4000, scoped, tag = 'output window, operand 0, single buffered']
    #allocation6 [shape = 'u8[16384]{0}', space=vmem, size = 0x4000, scoped, tag = 'output window, operand 1, single buffered']
    #allocation7 [shape = 's32[1]{0}', space=sflag, size = 0x4, scoped, tag = 'scoped memory for tpu_custom_call.1']
    %11 = vsyncpa [#allocation3], 0
    %12 = vsyncpa [#allocation4], 0
    %13 = vsyncpa [#allocation7], 0
    // Predicated region
    $region2: #{tpu_custom_call.1} parent=1 // pred_check
      _
    $region3: #{tpu_custom_call.1} parent=1 // pred_check_branch
      %15 = sbr.rel (0) target = $region5
    $region4: #{tpu_custom_call.1} parent=1 // pred_region
      %17 = vsyncadd [#allocation3], 0
      %s18 = sshll.u32 %s0, 4
      %s19 = int_to_ptr.hbm [resolvable:$true] %s18
      %s20 = sshll.u32 [#allocation2], 4
      %s21 = int_to_ptr.vmem [resolvable:$true] %s20
      %26 = dma.hbm_to_vmem [thread:$0]  %s19, 1024, %s21, [#allocation3], 128, 128, 8
    $region5: #{tpu_custom_call.1} parent=1 // pred_fallthru
      _
    // Predicated region
    $region6: #{tpu_custom_call.1} parent=1 // pred_check
      _
    $region7: #{tpu_custom_call.1} parent=1 // pred_check_branch
      %28 = sbr.rel (0) target = $region9
    $region8: #{tpu_custom_call.1} parent=1 // pred_region
      _
    $region9: #{tpu_custom_call.1} parent=1 // pred_fallthru
      _
    // Predicated region
    $region10: #{tpu_custom_call.1} parent=1 // pred_check
      _
    $region11: #{tpu_custom_call.1} parent=1 // pred_check_branch
      %30 = sbr.rel (0) target = $region13
    $region12: #{tpu_custom_call.1} parent=1 // pred_region
      _
    $region13: #{tpu_custom_call.1} parent=1 // pred_fallthru
      _
    // Predicated region
    $region14: #{tpu_custom_call.1} parent=1 // pred_check
      _
    $region15: #{tpu_custom_call.1} parent=1 // pred_check_branch
      %32 = sbr.rel (0) target = $region17
    $region16: #{tpu_custom_call.1} parent=1 // pred_region
      %34 = dma.done [#allocation3], 1024
    $region17: #{tpu_custom_call.1} parent=1 // pred_fallthru
      _
    %v35 = vld [vmem:[#allocation2] sm:$0xff]
    %v36 = vld [vmem:[#allocation2 + $0x8] sm:$0xff]
    %v37 = vld [vmem:[#allocation2 + $0x10] sm:$0xff]
    %v38 = vld [vmem:[#allocation2 + $0x18] sm:$0xff]
    %v39 = vld [vmem:[#allocation2 + $0x20] sm:$0xff]
    %v40 = vld [vmem:[#allocation2 + $0x28] sm:$0xff]
    %v41 = vld [vmem:[#allocation2 + $0x30] sm:$0xff]
    %v42 = vld [vmem:[#allocation2 + $0x38] sm:$0xff]
    %v43 = vld [vmem:[%s1] sm:$0xff]
    %v44 = vld [vmem:[%s1 + $0x8] sm:$0xff]
    %v45 = vld [vmem:[%s1 + $0x10] sm:$0xff]
    %v46 = vld [vmem:[%s1 + $0x18] sm:$0xff]
    %v47 = vld [vmem:[%s2] sm:$0xff]
    %v48 = vld [vmem:[%s2 + $0x8] sm:$0xff]
    %v49 = vld [vmem:[%s2 + $0x10] sm:$0xff]
    %v50 = vld [vmem:[%s2 + $0x18] sm:$0xff]
    %v51 = vmul.f32 %v35, %v35
    %v52 = vmul.f32 %v36, %v36
    %v53 = vmul.f32 %v37, %v37
    %v54 = vmul.f32 %v38, %v38
    %v55 = vmul.f32 %v39, %v39
    %v56 = vmul.f32 %v40, %v40
    %v57 = vmul.f32 %v41, %v41
    %v58 = vmul.f32 %v42, %v42
    %v59 = vadd.f32 %v51, %v52
    %v60 = vadd.f32 %v59, %v53
    %v61 = vadd.f32 %v60, %v54
    %v62 = vadd.f32 %v61, %v55
    %v63 = vadd.f32 %v62, %v56
    %v64 = vadd.f32 %v63, %v57
    %v65 = vadd.f32 %v64, %v58
    %v66 = vrot.slane %v65, 4
    %v67 = vadd.f32 %v65, %v66
    %v68 = vrot.slane %v67, 2
    %v69 = vadd.f32 %v67, %v68
    %v70 = vrot.slane %v69, 1
    %v71 = vadd.f32 %v69, %v70
    %vm72 = vcmask 523264
    %v74 = vsel %vm72, %v43, 0
    %v77 = vsel %vm72, %v44, 0
    %v80 = vsel %vm72, %v45, 0
    %v83 = vsel %vm72, %v46, 0
    %85 = vmatpush.msra.mxu0 0.0
    %86 = vmatpush.msra.mxu0 0.0
    %87 = vmatpush.msra.mxu0 0.0
    %88 = vmatpush.msra.mxu0 0.0
    %89 = vmatpush.msra.mxu0 0.0
    %90 = vmatpush.msra.mxu0 0.0
    %91 = vmatpush.msra.mxu0 0.0
    %92 = vmatpush.msra.mxu0 0.0
    %93 = vmatpush.msra.mxu0 %v42
    %94 = vmatpush.msra.mxu0 %v41
    %95 = vmatpush.msra.mxu0 %v40
    %96 = vmatpush.msra.mxu0 %v39
    %97 = vmatpush.msra.mxu0 %v38
    %98 = vmatpush.msra.mxu0 %v37
    %99 = vmatpush.msra.mxu0 %v36
    %100 = vmatpush.msra.mxu0 %v35
    %101 = vmatmul.f32.gmra.mxu0 %v74
    %v102 = vpop.f32.mrf.mxu0
    %v103 = vadd.f32 0.0, %v102
    %104 = vmatmul.f32.gmra.mxu0 %v77
    %v105 = vpop.f32.mrf.mxu0
    %v106 = vadd.f32 0.0, %v105
    %107 = vmatmul.f32.gmra.mxu0 %v80
    %v108 = vpop.f32.mrf.mxu0
    %v109 = vadd.f32 0.0, %v108
    %110 = vmatmul.f32.gmra.mxu0 %v83
    %v111 = vpop.f32.mrf.mxu0
    %v112 = vadd.f32 0.0, %v111
    %113 = vdwg.mxu0
    %v114 = vmul.f32 %v103, 2.0
    %v115 = vmul.f32 %v106, 2.0
    %v116 = vmul.f32 %v109, 2.0
    %v117 = vmul.f32 %v112, 2.0
    %119 = vset.pattern.permute.xlu0 0
    %120 = vperm.xlu0 %119, %v47
    %v121 = vpop.permute.xlu0 %120
    %124 = vset.pattern.permute.xlu0 0
    %125 = vperm.xlu0 %124, %v48
    %v126 = vpop.permute.xlu0 %125
    %129 = vset.pattern.permute.xlu0 0
    %130 = vperm.xlu0 %129, %v49
    %v131 = vpop.permute.xlu0 %130
    %134 = vset.pattern.permute.xlu0 0
    %135 = vperm.xlu0 %134, %v50
    %v136 = vpop.permute.xlu0 %135
    %v138 = vsub.f32 %v121, %v114
    %v139 = vsub.f32 %v126, %v115
    %v140 = vsub.f32 %v131, %v116
    %v141 = vsub.f32 %v136, %v117
    %v142 = vadd.f32 %v138, %v71
    %v143 = vadd.f32 %v139, %v71
    %v144 = vadd.f32 %v140, %v71
    %v145 = vadd.f32 %v141, %v71
    %v146 = vmax.f32 %v142, 0.0
    %v147 = vmax.f32 %v143, 0.0
    %v148 = vmax.f32 %v144, 0.0
    %v149 = vmax.f32 %v145, 0.0
    %v150 = vadd.f32 %v146, 1.0
    %v151 = vadd.f32 %v147, 1.0
    %v152 = vadd.f32 %v148, 1.0
    %v153 = vadd.f32 %v149, 1.0
    %v154 = vadd.f32 %v146, 0.0001
    %v155 = vadd.f32 %v147, 0.0001
    %v156 = vadd.f32 %v148, 0.0001
    %v157 = vadd.f32 %v149, 0.0001
    %v158 = vrcp.pop %v154
    %v159 = vmul.f32 %v154, %v158
    %v160 = vsub.f32 1.0, %v159
    %v161 = vmul.f32 %v158, %v160
    %v162 = vadd.f32 %v158, %v161
    %vm163 = vweird.f32 %v154
    %vm164 = vweird.f32 %v158
    %vm165 = vmor %vm163, %vm164
    %v166 = vsel %vm165, %v158, %v162
    %v167 = vand.u32 2147483647, %v154
    %vm168 = vcmp.eq.f32.partialorder %v167, 8.507059e+37
    %v169 = vand.u32 %v154, 2147483648
    %v170 = vor.u32 1.1754944e-38, %v169
    %v171 = vsel %vm168, %v170, %v166
    %v172 = vrcp.pop %v155
    %v173 = vmul.f32 %v155, %v172
    %v174 = vsub.f32 1.0, %v173
    %v175 = vmul.f32 %v172, %v174
    %v176 = vadd.f32 %v172, %v175
    %vm177 = vweird.f32 %v155
    %vm178 = vweird.f32 %v172
    %vm179 = vmor %vm177, %vm178
    %v180 = vsel %vm179, %v172, %v176
    %v181 = vand.u32 2147483647, %v155
    %vm182 = vcmp.eq.f32.partialorder %v181, 8.507059e+37
    %v183 = vand.u32 %v155, 2147483648
    %v184 = vor.u32 1.1754944e-38, %v183
    %v185 = vsel %vm182, %v184, %v180
    %v186 = vrcp.pop %v156
    %v187 = vmul.f32 %v156, %v186
    %v188 = vsub.f32 1.0, %v187
    %v189 = vmul.f32 %v186, %v188
    %v190 = vadd.f32 %v186, %v189
    %vm191 = vweird.f32 %v156
    %vm192 = vweird.f32 %v186
    %vm193 = vmor %vm191, %vm192
    %v194 = vsel %vm193, %v186, %v190
    %v195 = vand.u32 2147483647, %v156
    %vm196 = vcmp.eq.f32.partialorder %v195, 8.507059e+37
    %v197 = vand.u32 %v156, 2147483648
    %v198 = vor.u32 1.1754944e-38, %v197
    %v199 = vsel %vm196, %v198, %v194
    %v200 = vrcp.pop %v157
    %v201 = vmul.f32 %v157, %v200
    %v202 = vsub.f32 1.0, %v201
    %v203 = vmul.f32 %v200, %v202
    %v204 = vadd.f32 %v200, %v203
    %vm205 = vweird.f32 %v157
    %vm206 = vweird.f32 %v200
    %vm207 = vmor %vm205, %vm206
    %v208 = vsel %vm207, %v200, %v204
    %v209 = vand.u32 2147483647, %v157
    %vm210 = vcmp.eq.f32.partialorder %v209, 8.507059e+37
    %v211 = vand.u32 %v157, 2147483648
    %v212 = vor.u32 1.1754944e-38, %v211
    %v213 = vsel %vm210, %v212, %v208
    %v214 = vmul.f32 %v150, %v171
    %v215 = vmul.f32 %v151, %v185
    %v216 = vmul.f32 %v152, %v199
    %v217 = vmul.f32 %v153, %v213
    %v218 = vlog2.pop %v214
    %v219 = vmul.f32 %v218, 0.6931472
    %v220 = vlog2.pop %v215
    %v221 = vmul.f32 %v220, 0.6931472
    %v222 = vlog2.pop %v216
    %v223 = vmul.f32 %v222, 0.6931472
    %v224 = vlog2.pop %v217
    %v225 = vmul.f32 %v224, 0.6931472
    %226 = vst [vmem:[#allocation5] sm:$0xff] %v146
    %227 = vst [vmem:[#allocation5 + $0x8] sm:$0xff] %v147
    %228 = vst [vmem:[#allocation5 + $0x10] sm:$0xff] %v148
    %229 = vst [vmem:[#allocation5 + $0x18] sm:$0xff] %v149
    %230 = vst [vmem:[#allocation6] sm:$0xff] %v219
    %231 = vst [vmem:[#allocation6 + $0x8] sm:$0xff] %v221
    %232 = vst [vmem:[#allocation6 + $0x10] sm:$0xff] %v223
    %233 = vst [vmem:[#allocation6 + $0x18] sm:$0xff] %v225
    %v234 = vlaneseq
    %v235 = vand.u32 %v234, 127
    %vm236 = vcmp.ge.s32.totalorder %v235, 0
    %vm237 = vcmp.lt.s32.totalorder %v235, 49
    %vm238 = vmand %vm236, %vm237
    %v239 = vsel %vm238, %v219, -inf
    %v240 = vsel %vm238, %v221, -inf
    %v241 = vsel %vm238, %v223, -inf
    %v242 = vsel %vm238, %v225, -inf
    %243 = vmax.xlane.f32.xlu0 %v239
    %v244 = vpop.xlane.xlu0 %243
    %245 = vmax.xlane.f32.xlu0 %v240
    %v246 = vpop.xlane.xlu0 %245
    %247 = vmax.xlane.f32.xlu0 %v241
    %v248 = vpop.xlane.xlu0 %247
    %249 = vmax.xlane.f32.xlu0 %v242
    %v250 = vpop.xlane.xlu0 %249
    %vm251 = vcmp.ge.s32.totalorder %v235, 49
    %vm252 = vcmp.lt.s32.totalorder %v235, 98
    %vm253 = vmand %vm251, %vm252
    %v254 = vsel %vm253, %v219, -inf
    %v255 = vsel %vm253, %v221, -inf
    %v256 = vsel %vm253, %v223, -inf
    %v257 = vsel %vm253, %v225, -inf
    %258 = vmax.xlane.f32.xlu0 %v254
    %v259 = vpop.xlane.xlu0 %258
    %260 = vmax.xlane.f32.xlu0 %v255
    %v261 = vpop.xlane.xlu0 %260
    %262 = vmax.xlane.f32.xlu0 %v256
    %v263 = vpop.xlane.xlu0 %262
    %264 = vmax.xlane.f32.xlu0 %v257
    %v265 = vpop.xlane.xlu0 %264
    %vm266 = vcmask 7168
    %v267 = vsel %vm266, %v244, %v259
    %v268 = vsel %vm266, %v246, %v261
    %v269 = vsel %vm266, %v248, %v263
    %v270 = vsel %vm266, %v250, %v265
    %vm271 = vcmask 15360
    %272 = vst.msk [vmem:[%s5] sm:$0xff] %vm271, %v267
    %273 = vst.msk [vmem:[%s5 + $0x8] sm:$0xff] %vm271, %v268
    %274 = vst.msk [vmem:[%s5 + $0x10] sm:$0xff] %vm271, %v269
    %275 = vst.msk [vmem:[%s5 + $0x18] sm:$0xff] %vm271, %v270
    // Predicated region
    $region18: #{tpu_custom_call.1} parent=1 // pred_check
      _
    $region19: #{tpu_custom_call.1} parent=1 // pred_check_branch
      %277 = sbr.rel (0) target = $region21
    $region20: #{tpu_custom_call.1} parent=1 // pred_region
      %279 = vsyncadd [#allocation4], 0
      %s280 = sshll.u32 [#allocation5], 4
      %s281 = int_to_ptr.vmem [resolvable:$true] %s280
      %s282 = sshll.u32 %s3, 4
      %s283 = int_to_ptr.hbm [resolvable:$true] %s282
      %288 = dma.vmem_to_hbm [thread:$0]  %s281, 512, %s283, [#allocation4], 128, 128, 8
    $region21: #{tpu_custom_call.1} parent=1 // pred_fallthru
      _
    // Predicated region
    $region22: #{tpu_custom_call.1} parent=1 // pred_check
      _
    $region23: #{tpu_custom_call.1} parent=1 // pred_check_branch
      %290 = sbr.rel (0) target = $region25
    $region24: #{tpu_custom_call.1} parent=1 // pred_region
      %292 = vsyncadd [#allocation7], 0
      %s293 = sshll.u32 [#allocation6], 4
      %s294 = int_to_ptr.vmem [resolvable:$true] %s293
      %s295 = sshll.u32 %s4, 4
      %s296 = int_to_ptr.hbm [resolvable:$true] %s295
      %301 = dma.vmem_to_hbm [thread:$0]  %s294, 512, %s296, [#allocation7], 128, 128, 8
    $region25: #{tpu_custom_call.1} parent=1 // pred_fallthru
      _
    // Predicated region
    $region26: #{tpu_custom_call.1} parent=1 // pred_check
      _
    $region27: #{tpu_custom_call.1} parent=1 // pred_check_branch
      %303 = sbr.rel (0) target = $region29
    $region28: #{tpu_custom_call.1} parent=1 // pred_region
      _
    $region29: #{tpu_custom_call.1} parent=1 // pred_fallthru
      _
    // Predicated region
    $region30: #{tpu_custom_call.1} parent=1 // pred_check
      _
    $region31: #{tpu_custom_call.1} parent=1 // pred_check_branch
      %305 = sbr.rel (0) target = $region33
    $region32: #{tpu_custom_call.1} parent=1 // pred_region
      %307 = dma.done [#allocation4], 512
    $region33: #{tpu_custom_call.1} parent=1 // pred_fallthru
      _
    // Predicated region
    $region34: #{tpu_custom_call.1} parent=1 // pred_check
      _
    $region35: #{tpu_custom_call.1} parent=1 // pred_check_branch
      %309 = sbr.rel (0) target = $region37
    $region36: #{tpu_custom_call.1} parent=1 // pred_region
      %311 = dma.done [#allocation7], 512
    $region37: #{tpu_custom_call.1} parent=1 // pred_fallthru
      _
    // Predicated region
    $region38: #{tpu_custom_call.1} parent=1 // pred_check
      _
    $region39: #{tpu_custom_call.1} parent=1 // pred_check_branch
      %313 = sbr.rel (0) target = $region41
    $region40: #{tpu_custom_call.1} parent=1 // pred_region
      _
    $region41: #{tpu_custom_call.1} parent=1 // pred_fallthru
      _
    %314 = vsyncpa [#allocation3], 1
    %315 = vsyncpa [#allocation4], 1
    %316 = vsyncpa [#allocation7], 1

</llo_original>
